<compile_context>
chip_gen: v7x
topology: tpu7x:2x2x1
jax: 0.10.0
libtpu: 0.0.40
codegen_flags: <defaults>
</compile_context>

<pallas_src>
import jax
import jax.numpy as jnp
from jax.experimental import pallas as pl
from jax.experimental.pallas import tpu as pltpu


def _round_up(x, m):
    return ((x + m - 1) // m) * m


def _cdiv(a, b):
    return (a + b - 1) // b


def _vmem_capacity_bytes():
    """Generation-aware VMEM capacity (falls back conservatively if query fails)."""
    try:
        cap = int(getattr(pltpu.get_tpu_info(), "vmem_capacity_bytes", 0))
        if cap > 0:
            return cap
    except Exception:
        pass
    try:
        if "v7" in jax.devices()[0].device_kind.lower():
            return 64 * 1024 * 1024
    except Exception:
        pass
    return 128 * 1024 * 1024


def _is_multi_tensorcore():
    """Only v7x has 2 TensorCores per chip."""
    try:
        return "v7" in jax.devices()[0].device_kind.lower()
    except Exception:
        return False


# ---------------------------------------------------------------------------
# Pallas kernel: one (C2, tp) output tile of image n, reduced over the K axis.
#   x_ref:     (1, tk, tp)  bf16  activation columns (output positions on lanes)
#   w_ref:     (C2, tk)     bf16  BN-scale-folded weights
#   shift_ref: (C2, 1)      f32   BN shift
#   o_ref:     (1, C2, tp)  bf16  output tile
#   acc_ref:   (C2, tp)     f32   VMEM accumulator scratch
# ---------------------------------------------------------------------------
def _conv_bn_silu_kernel(x_ref, w_ref, shift_ref, o_ref, acc_ref):
    kk = pl.program_id(2)

    @pl.when(kk == 0)
    def _init():
        acc_ref[...] = jnp.zeros_like(acc_ref)

    acc_ref[...] += jnp.dot(w_ref[...], x_ref[0],
                            preferred_element_type=jnp.float32)

    @pl.when(kk == pl.num_programs(2) - 1)
    def _finish():
        y = acc_ref[...] + shift_ref[...]                  # BatchNorm (inference, folded)
        # SiLU: y * sigmoid(y); divide on the EUP approximate-reciprocal path.
        sig = pl.reciprocal(1.0 + jnp.exp(-y), approx=True)
        o_ref[0] = (y * sig).astype(o_ref.dtype)


def conv_bn_silu(x, w, gamma, beta, running_mean, running_var, *,
                 s=1, eps=1e-5, out_dtype=jnp.bfloat16):
    """Fused Conv2d(bias=False, pad=0, groups=1) + BatchNorm2d(eval) + SiLU.

    x: (N, C1, H, W) NCHW, w: (C2, C1, k, k) OIHW (PyTorch conventions).
    Returns (N, C2, Ho, Wo) in `out_dtype` (bf16 by default for HBM-writeback savings).
    """
    N, C1, H, W = x.shape
    C2, C1w, kh, kw = w.shape
    assert kh == kw, "square kernels only"
    assert C1w == C1, "grouped conv (g > 1) not supported"   # TODO(synk): groups > 1
    k = kh
    Ho = (H - k) // s + 1
    Wo = (W - k) // s + 1
    L = Ho * Wo
    K = k * k * C1

    # --- activations: (N, K, L) bf16, output positions on the lane axis ------
    xb = x.astype(jnp.bfloat16)
    if k == 1:
        if s > 1:
            xb = xb[:, :, ::s, ::s]
        xt = xb.reshape(N, C1, L)        # zero-copy for s == 1: no transpose, no im2col
    else:
        # TODO(synk): k > 1 still materializes the patch matrix in HBM (k^2 blowup).
        cols = []
        for i in range(k):
            for j in range(k):
                cols.append(xb[:, :, i:i + s * (Ho - 1) + 1:s,
                                      j:j + s * (Wo - 1) + 1:s])
        xt = jnp.stack(cols, axis=1).reshape(N, K, L)       # rows ordered (ki, kj, c1)

    # --- fold BatchNorm (inference) into weight rows + per-channel shift -----
    inv_std = 1.0 / jnp.sqrt(running_var.astype(jnp.float32) + eps)
    scale = gamma.astype(jnp.float32) * inv_std                          # (C2,)
    shift = (beta.astype(jnp.float32)
             - running_mean.astype(jnp.float32) * scale).reshape(C2, 1)  # (C2, 1) f32

    wt = jnp.transpose(w.astype(jnp.float32), (0, 2, 3, 1)).reshape(C2, K)
    wt = (wt * scale[:, None]).astype(jnp.bfloat16)                      # (C2, K) bf16

    # --- generation-aware VMEM budget & tile selection ------------------------
    vmem_cap = _vmem_capacity_bytes()
    if vmem_cap >= 96 * 1024 * 1024:         # v5e / v6e: 128 MiB physical VMEM
        vmem_budget = 88 * 1024 * 1024
        vmem_limit_cap = 112 * 1024 * 1024
        tp_max = 1024
    else:                                     # v7x: 64 MiB per TensorCore
        vmem_budget = 36 * 1024 * 1024
        vmem_limit_cap = 52 * 1024 * 1024
        tp_max = 512

    tp = L if L <= tp_max else tp_max         # lane tile over output positions
    nK = 1                                    # number of K (contraction) grid tiles

    def _tk(nK_):
        # Fixed rounding: padding per tile is < 128 columns (never round to tile size).
        return _round_up(_cdiv(K, nK_), 128)

    def _vmem_bytes(tp_, nK_):
        tk_ = _tk(nK_)
        return (2 * tk_ * tp_ * 2        # X block  (bf16, double-buffered)
                + 2 * C2 * tk_ * 2       # W block  (bf16; counted double-buffered)
                + 2 * C2 * tp_ * 2       # O block  (bf16, double-buffered)
                + C2 * tp_ * 4           # f32 accumulator scratch
                + 2 * C2 * 4)            # BN shift

    while _vmem_bytes(tp, nK) > vmem_budget:
        if tp > 256:
            tp = _round_up(tp // 2, 128)
        elif _tk(nK) > 256:
            nK += 1                      # W / X K-extent dominates -> tile the reduction
        elif tp > 128:
            tp = 128
        else:
            break

    # Only v7x (2 TensorCores) benefits from forcing >= 2 parallel tiles.
    if _is_multi_tensorcore() and N * _cdiv(L, tp) < 2 and L > 256:
        tp = _round_up(_cdiv(L, 2), 128)

    tk = _tk(nK)
    Kp = nK * tk
    if Kp != K:                          # zero-pad the contraction (< 128 cols per tile)
        xt = jnp.pad(xt, ((0, 0), (0, Kp - K), (0, 0)))
        wt = jnp.pad(wt, ((0, 0), (0, Kp - K)))

    vmem_limit = int(min(vmem_limit_cap,
                         max(32 * 1024 * 1024, 2 * _vmem_bytes(tp, nK))))

    grid = (N, _cdiv(L, tp), nK)         # reduction axis last; ragged L tile masked

    out = pl.pallas_call(
        _conv_bn_silu_kernel,
        out_shape=jax.ShapeDtypeStruct((N, C2, L), out_dtype),
        grid_spec=pltpu.PrefetchScalarGridSpec(
            num_scalar_prefetch=0,
            grid=grid,
            in_specs=[
                pl.BlockSpec((1, tk, tp), lambda n, j, kk: (n, kk, j)),  # activations
                pl.BlockSpec((C2, tk), lambda n, j, kk: (0, kk)),        # weights (resident if nK==1)
                pl.BlockSpec((C2, 1), lambda n, j, kk: (0, 0)),          # BN shift
            ],
            out_specs=pl.BlockSpec((1, C2, tp), lambda n, j, kk: (n, 0, j)),
            scratch_shapes=[pltpu.VMEM((C2, tp), jnp.float32)],
        ),
        compiler_params=pltpu.CompilerParams(
            dimension_semantics=("parallel", "parallel", "arbitrary"),
            vmem_limit_bytes=vmem_limit),
    )(xt, wt, shift)

    # Pure metadata reshape: no slice, no transpose, already NCHW-ordered.
    return out.reshape(N, C2, Ho, Wo)


# ---------------------------------------------------------------------------
# Reference + self-test
# ---------------------------------------------------------------------------
def _reference(x, w, gamma, beta, rmean, rvar, *, s=1, eps=1e-5):
    y = jax.lax.conv_general_dilated(
        x.astype(jnp.float32), w.astype(jnp.float32),
        window_strides=(s, s), padding="VALID",
        dimension_numbers=("NCHW", "OIHW", "NCHW"))
    y = (y - rmean[None, :, None, None]) / jnp.sqrt(rvar[None, :, None, None] + eps)
    y = y * gamma[None, :, None, None] + beta[None, :, None, None]
    return y * jax.nn.sigmoid(y)


def _make_inputs(key, N, C1, H, W, C2, k):
    kx, kw, kg, kb, km, kv = jax.random.split(key, 6)
    x = jax.random.normal(kx, (N, C1, H, W), dtype=jnp.float32)
    w = jax.random.normal(kw, (C2, C1, k, k), dtype=jnp.float32) * 0.1   # Conv2d weight, bias=False
    gamma = jax.random.normal(kg, (C2,), dtype=jnp.float32) * 0.1 + 1.0  # BN weight
    beta = jax.random.normal(kb, (C2,), dtype=jnp.float32) * 0.1         # BN bias
    rmean = jax.random.normal(km, (C2,), dtype=jnp.float32) * 0.1
    rvar = jax.random.uniform(kv, (C2,), dtype=jnp.float32, minval=0.5, maxval=1.5)
    return x, w, gamma, beta, rmean, rvar


if __name__ == "__main__":
    key = jax.random.PRNGKey(0)
    k1, k2 = jax.random.split(key)

    # Case 1: Conv(c1=4, c2=8, k=1, s=1) -- the module defaults (1x1 fast path).
    x, w, g, b, rm, rv = _make_inputs(k1, 2, 4, 16, 16, 8, 1)
    out = jax.block_until_ready(conv_bn_silu(x, w, g, b, rm, rv, s=1))
    ref = _reference(x, w, g, b, rm, rv, s=1)
    assert out.shape == (2, 8, 16, 16)
    assert jnp.allclose(out.astype(jnp.float32), ref, atol=2e-2, rtol=2e-2), "k=1 mismatch"

    # Case 2: Conv(c1=3, c2=16, k=3, s=2) -- strided 3x3 (general path).
    x, w, g, b, rm, rv = _make_inputs(k2, 2, 3, 16, 16, 16, 3)
    out = jax.block_until_ready(conv_bn_silu(x, w, g, b, rm, rv, s=2))
    ref = _reference(x, w, g, b, rm, rv, s=2)
    assert out.shape == (2, 16, 7, 7)
    assert jnp.allclose(out.astype(jnp.float32), ref, atol=2e-2, rtol=2e-2), "k=3 mismatch"

    print("KERNEL_OK")
</pallas_src>

<mosaic_0001>
module attributes {stable_mosaic.version = 11 : i64} {
  func.func @_conv_bn_silu_kernel(%arg0: i32, %arg1: i32, %arg2: i32, %arg3: memref<1x128x256xbf16, #tpu.memory_space<vmem>>, %arg4: memref<8x128xbf16, #tpu.memory_space<vmem>>, %arg5: memref<8x1xf32, #tpu.memory_space<vmem>>, %arg6: memref<1x8x256xbf16, #tpu.memory_space<vmem>>, %arg7: memref<8x256xf32, #tpu.memory_space<vmem>>) attributes {dimension_semantics = [#tpu.dimension_semantics<parallel>, #tpu.dimension_semantics<parallel>, #tpu.dimension_semantics<arbitrary>], iteration_bounds = array<i64: 2, 1, 1>, scalar_prefetch = 0 : i64, scratch_operands = 1 : i64, tpu.core_type = #tpu.core_type<tc>, window_params = [{transform_indices = @transform_0, window_bounds = array<i64: 1, 128, 256>}, {transform_indices = @transform_1, window_bounds = array<i64: 8, 128>}, {pipeline_mode = #tpu.pipeline_mode<synchronous>, transform_indices = @transform_2, window_bounds = array<i64: 8, 1>}, {transform_indices = @transform_3, window_bounds = array<i64: 1, 8, 256>}]} {
    %c0_i32 = arith.constant 0 : i32
    %0 = arith.cmpi eq, %arg2, %c0_i32 : i32
    %1 = arith.extui %0 : i1 to i32
    %c0_i32_0 = arith.constant 0 : i32
    %2 = arith.cmpi ne, %1, %c0_i32_0 : i32
    scf.if %2 {
      %cst_11 = arith.constant 0.000000e+00 : f32
      %13 = vector.broadcast %cst_11 : f32 to vector<8x256xf32>
      %c0_12 = arith.constant 0 : index
      %c0_13 = arith.constant 0 : index
      %14 = vector.load %arg7[%c0_12, %c0_13] : memref<8x256xf32, #tpu.memory_space<vmem>>, vector<8x256xf32>
      tpu.vector_store %arg7[%c0_12, %c0_13], %13 {strides = array<i32>} : memref<8x256xf32, #tpu.memory_space<vmem>>, vector<8x256xf32>,
    } else {
    }
    %c0 = arith.constant 0 : index
    %c0_1 = arith.constant 0 : index
    %3 = vector.load %arg7[%c0, %c0_1] : memref<8x256xf32, #tpu.memory_space<vmem>>, vector<8x256xf32>
    %c0_2 = arith.constant 0 : index
    %c0_3 = arith.constant 0 : index
    %4 = vector.load %arg4[%c0_2, %c0_3] : memref<8x128xbf16, #tpu.memory_space<vmem>>, vector<8x128xbf16>
    %c0_4 = arith.constant 0 : index
    %c0_5 = arith.constant 0 : index
    %c0_6 = arith.constant 0 : index
    %5 = vector.load %arg3[%c0_4, %c0_5, %c0_6] : memref<1x128x256xbf16, #tpu.memory_space<vmem>>, vector<1x128x256xbf16>
    %6 = vector.shape_cast %5 : vector<1x128x256xbf16> to vector<128x256xbf16>
    %cst = arith.constant dense<0.000000e+00> : vector<8x256xf32>
    %7 = tpu.matmul %4, %6, %cst {dimension_numbers = #tpu.dot_dimension_numbers<[1], [0], [0], [1], [0, 0, 1, 1], [], []>} : vector<8x128xbf16>, vector<128x256xbf16>, vector<8x256xf32> -> vector<8x256xf32>
    %8 = arith.addf %3, %7 : vector<8x256xf32>
    %c0_7 = arith.constant 0 : index
    %c0_8 = arith.constant 0 : index
    %9 = vector.load %arg7[%c0_7, %c0_8] : memref<8x256xf32, #tpu.memory_space<vmem>>, vector<8x256xf32>
    tpu.vector_store %arg7[%c0_7, %c0_8], %8 {strides = array<i32>} : memref<8x256xf32, #tpu.memory_space<vmem>>, vector<8x256xf32>,
    %c0_i32_9 = arith.constant 0 : i32
    %10 = arith.cmpi eq, %arg2, %c0_i32_9 : i32
    %11 = arith.extui %10 : i1 to i32
    %c0_i32_10 = arith.constant 0 : i32
    %12 = arith.cmpi ne, %11, %c0_i32_10 : i32
    scf.if %12 {
      %c0_11 = arith.constant 0 : index
      %c0_12 = arith.constant 0 : index
      %13 = vector.load %arg7[%c0_11, %c0_12] : memref<8x256xf32, #tpu.memory_space<vmem>>, vector<8x256xf32>
      %c0_13 = arith.constant 0 : index
      %c0_14 = arith.constant 0 : index
      %14 = vector.load %arg5[%c0_13, %c0_14] : memref<8x1xf32, #tpu.memory_space<vmem>>, vector<8x1xf32>
      %15 = vector.broadcast %14 : vector<8x1xf32> to vector<8x256xf32>
      %16 = arith.addf %13, %15 : vector<8x256xf32>
      %cst_15 = arith.constant 0.000000e+00 : f32
      %17 = vector.broadcast %cst_15 : f32 to vector<8x256xf32>
      %18 = arith.subf %17, %16 : vector<8x256xf32>
      %19 = math.exp %18 : vector<8x256xf32>
      %cst_16 = arith.constant 1.000000e+00 : f32
      %20 = vector.broadcast %cst_16 : f32 to vector<8x256xf32>
      %21 = arith.addf %20, %19 : vector<8x256xf32>
      %22 = tpu.reciprocal %21 {approx = true} : vector<8x256xf32> -> vector<8x256xf32>
      %23 = arith.mulf %16, %22 : vector<8x256xf32>
      %24 = arith.truncf %23 : vector<8x256xf32> to vector<8x256xbf16>
      %c0_17 = arith.constant 0 : index
      %c0_18 = arith.constant 0 : index
      %c0_19 = arith.constant 0 : index
      %25 = vector.load %arg6[%c0_17, %c0_18, %c0_19] : memref<1x8x256xbf16, #tpu.memory_space<vmem>>, vector<1x8x256xbf16>
      %26 = vector.shape_cast %25 : vector<1x8x256xbf16> to vector<8x256xbf16>
      %27 = vector.shape_cast %24 : vector<8x256xbf16> to vector<1x8x256xbf16>
      tpu.vector_store %arg6[%c0_17, %c0_18, %c0_19], %27 {strides = array<i32>} : memref<1x8x256xbf16, #tpu.memory_space<vmem>>, vector<1x8x256xbf16>,
    } else {
    }
    return
  }
  func.func @transform_0(%arg0: i32, %arg1: i32, %arg2: i32) -> (i32, i32, i32) {
    %c0_i32 = arith.constant 0 : i32
    return %arg0, %arg2, %arg1 : i32, i32, i32
  }
  func.func @transform_1(%arg0: i32, %arg1: i32, %arg2: i32) -> (i32, i32) {
    %c0_i32 = arith.constant 0 : i32
    %c0_i32_0 = arith.constant 0 : i32
    return %c0_i32, %arg2 : i32, i32
  }
  func.func @transform_2(%arg0: i32, %arg1: i32, %arg2: i32) -> (i32, i32) {
    %c0_i32 = arith.constant 0 : i32
    %c0_i32_0 = arith.constant 0 : i32
    %c0_i32_1 = arith.constant 0 : i32
    return %c0_i32, %c0_i32_0 : i32, i32
  }
  func.func @transform_3(%arg0: i32, %arg1: i32, %arg2: i32) -> (i32, i32, i32) {
    %c0_i32 = arith.constant 0 : i32
    %c0_i32_0 = arith.constant 0 : i32
    return %arg0, %c0_i32, %arg1 : i32, i32, i32
  }
}

</mosaic_0001>

<llo_original>
// kernel: tpu_custom_call.1
$region0: #{tpu_custom_call.1}
  #allocation0 [shape = 'u32[]', space=smem, size = 0x4, offset = 0x4, fixed_abs, tag = 'smem constant byte address 0x4 - core index']
  #allocation1 [shape = 'u32[144,128]{1,0:T(1,128)}', space=vmem, size = 0x12000, scoped, tag = 'internal scratch']
  #allocation2 [shape = 'f32[8,256]{1,0:T(8,128)}', space=vmem, size = 0x2000, scoped, tag = 'scratch operand']
  %s0 = inlined_call_operand.hbm [shape: bf16[2,128,256], index: 0, kind: input, shape index: {}]
  %s1 = inlined_call_operand.vmem [shape: bf16[8,128], index: 1, kind: input, shape index: {}]
  %s2 = inlined_call_operand.vmem [shape: f32[8,1], index: 2, kind: input, shape index: {}]
  %s3 = inlined_call_operand.hbm [shape: bf16[2,8,256], index: 3, kind: output, shape index: {}]
  %s4 = sld [smem:[#allocation0]]
  $region57: #{tpu_custom_call.1} parent=0
    _
  %s6 = ssub.s32 1, %s4
  %s7 = scalar_select 0, %s6, %s4
  $region1: #{tpu_custom_call.1} parent=0
    #allocation3 [shape = 'u8[131072]{0}', space=vmem, size = 0x20000, scoped, tag = 'input window, operand 0']
    #allocation4 [shape = 's32[2]{0}', space=sflag, size = 0x8, scoped, tag = 'scoped memory for tpu_custom_call.1']
    #allocation5 [shape = 's32[2]{0}', space=sflag, size = 0x8, scoped, tag = 'scoped memory for tpu_custom_call.1']
    #allocation6 [shape = 'u8[8192]{0}', space=vmem, size = 0x2000, scoped, tag = 'output window, operand 0']
    %8 = vsyncpa [#allocation4], 0
    %s9 = scalar_lea.sflag [#allocation4], 1
    %10 = vsyncpa %s9, 0
    %11 = vsyncpa [#allocation5], 0
    %s12 = scalar_lea.sflag [#allocation5], 1
    %13 = vsyncpa %s12, 0
    loop: start=0, step=1, limit=4
    $region2: #{tpu_custom_call.1} parent=1 // loop_pre_header
      _
    $region3: #{tpu_custom_call.1} parent=1 // loop_header
      %s15 = sphi 0, %s19
      %p16 = scmp.ge.s32.totalorder %s15, 4
      %s22 = sphi 0, %s41
      %s23 = sphi 0, %s37
      %s24 = sphi 0, %s33
      %s25 = sphi 0, %s22
      %s26 = sphi 0, %s23
      %s27 = sphi 0, %s24
      %s28 = sphi 0, %s25
      %s29 = sphi 0, %s26
      %s30 = sphi 0, %s27
      %s48 = sphi 0, %s50
      %s51 = sphi 0, %s48
      %s52 = sphi 0, %s51
      %s68 = sphi 0, %s52
      %s74 = sphi 0, %s76
      %s77 = sphi 0, %s74
      %s78 = sphi 0, %s77
      %s94 = sphi 0, %s78
      %s98 = sphi 0, %s98
      %s100 = sphi 0, %s98
      %s101 = sphi 0, %s100
      %s115 = sphi 0, %s101
      %s123 = sphi 0, %s125
      %s126 = sphi 0, %s123
      %s127 = sphi 0, %s126
      %s143 = sphi 0, %s127
    $region4: #{tpu_custom_call.1} parent=1 // loop_header_branch
      %18 = sbr.rel (%p16) target = $region8
    $region5: #{tpu_custom_call.1} parent=1 // loop_body
      %s20 = ssub.s32 %s15, 1
      %s21 = ssub.s32 %s15, 2
      %s31 = sadd.s32 1, %s24
      %p32 = scmp.ge.s32.totalorder %s31, 1
      %s33 = scalar_select %p32, 0, %s31
      %s34 = sadd.s32 1, %s23
      %s35 = scalar_select %p32, %s34, %s23
      %p36 = scmp.ge.s32.totalorder %s35, 1
      %s37 = scalar_select %p36, 0, %s35
      %s38 = sadd.s32 1, %s22
      %s39 = scalar_select %p36, %s38, %s22
      %p40 = scmp.ge.s32.totalorder %s39, 2
      %s41 = scalar_select %p40, 0, %s39
      %s42 = ssub.s32 %s22, %s41
      %s43 = ssub.s32 %s24, %s33
      %s44 = sor.u32 %s42, %s43
      %s45 = ssub.s32 %s23, %s37
      %s46 = sor.u32 %s44, %s45
      %p47 = scmp.eq.s32.totalorder %s46, 0
      %s49 = sadd.s32 %s48, 1
      %s50 = scalar_select %p47, %s48, %s49
      %p53 = pneg %p47
      %p54 = scmp.eq.s32.totalorder %s15, 1
      %p55 = por %p53, %p54
      %p56 = scmp.ne.s32.totalorder %s48, %s51
      %p57 = scmp.eq.s32.totalorder %s15, 0
      %p58 = por %p56, %p57
      %p59 = scmp.ne.s32.totalorder %s48, %s51
      %p60 = scmp.eq.s32.totalorder %s20, 1
      %p61 = por %p59, %p60
      %p62 = scmp.ne.s32.totalorder %s51, %s52
      %p63 = scmp.eq.s32.totalorder %s20, 0
      %p64 = por %p62, %p63
      %p65 = scmp.ne.s32.totalorder %s51, %s52
      %p66 = scmp.eq.s32.totalorder %s21, 1
      %p67 = por %p65, %p66
      %p69 = scmp.ne.s32.totalorder %s52, %s68
      %p70 = scmp.eq.s32.totalorder %s21, 0
      %p71 = por %p69, %p70
      %s72 = ssub.s32 %s24, %s33
      %p73 = scmp.eq.s32.totalorder %s72, 0
      %s75 = sadd.s32 %s74, 1
      %s76 = scalar_select %p73, %s74, %s75
      %p79 = pneg %p73
      %p80 = scmp.eq.s32.totalorder %s15, 1
      %p81 = por %p79, %p80
      %p82 = scmp.ne.s32.totalorder %s74, %s77
      %p83 = scmp.eq.s32.totalorder %s15, 0
      %p84 = por %p82, %p83
      %p85 = scmp.ne.s32.totalorder %s74, %s77
      %p86 = scmp.eq.s32.totalorder %s20, 1
      %p87 = por %p85, %p86
      %p88 = scmp.ne.s32.totalorder %s77, %s78
      %p89 = scmp.eq.s32.totalorder %s20, 0
      %p90 = por %p88, %p89
      %p91 = scmp.ne.s32.totalorder %s77, %s78
      %p92 = scmp.eq.s32.totalorder %s21, 1
      %p93 = por %p91, %p92
      %p95 = scmp.ne.s32.totalorder %s78, %s94
      %p96 = scmp.eq.s32.totalorder %s21, 0
      %p97 = por %p95, %p96
      %s99 = sadd.s32 %s98, 1
      %p102 = scmp.eq.s32.totalorder %s15, 1
      %p103 = scmp.ne.s32.totalorder %s98, %s100
      %p104 = scmp.eq.s32.totalorder %s15, 0
      %p105 = por %p103, %p104
      %p106 = scmp.ne.s32.totalorder %s98, %s100
      %p107 = scmp.eq.s32.totalorder %s20, 1
      %p108 = por %p106, %p107
      %p109 = scmp.ne.s32.totalorder %s100, %s101
      %p110 = scmp.eq.s32.totalorder %s20, 0
      %p111 = por %p109, %p110
      %p112 = scmp.ne.s32.totalorder %s100, %s101
      %p113 = scmp.eq.s32.totalorder %s21, 1
      %p114 = por %p112, %p113
      %p116 = scmp.ne.s32.totalorder %s101, %s115
      %p117 = scmp.eq.s32.totalorder %s21, 0
      %p118 = por %p116, %p117
      %s119 = ssub.s32 %s22, %s41
      %s120 = ssub.s32 %s23, %s37
      %s121 = sor.u32 %s119, %s120
      %p122 = scmp.eq.s32.totalorder %s121, 0
      %s124 = sadd.s32 %s123, 1
      %s125 = scalar_select %p122, %s123, %s124
      %p128 = pneg %p122
      %p129 = scmp.eq.s32.totalorder %s15, 1
      %p130 = por %p128, %p129
      %p131 = scmp.ne.s32.totalorder %s123, %s126
      %p132 = scmp.eq.s32.totalorder %s15, 0
      %p133 = por %p131, %p132
      %p134 = scmp.ne.s32.totalorder %s123, %s126
      %p135 = scmp.eq.s32.totalorder %s20, 1
      %p136 = por %p134, %p135
      %p137 = scmp.ne.s32.totalorder %s126, %s127
      %p138 = scmp.eq.s32.totalorder %s20, 0
      %p139 = por %p137, %p138
      %p140 = scmp.ne.s32.totalorder %s126, %s127
      %p141 = scmp.eq.s32.totalorder %s21, 1
      %p142 = por %p140, %p141
      %p144 = scmp.ne.s32.totalorder %s127, %s143
      %p145 = scmp.eq.s32.totalorder %s21, 0
      %p146 = por %p144, %p145
      %p147 = scmp.le.s32.totalorder 1, %s15
      %p148 = scmp.lt.s32.totalorder %s15, 3
      %p149 = pnand %p147, %p148
      %p150 = pneg %p149
      // Predicated region
      $region9: #{tpu_custom_call.1} parent=5 // pred_check
        _
      $region10: #{tpu_custom_call.1} parent=5 // pred_check_branch
        %152 = sbr.rel (%p149) target = $region12
      $region11: #{tpu_custom_call.1} parent=5 // pred_region
        %s153 = ssub.s32 %s15, 1
        // Predicated region
        $region13: #{tpu_custom_call.1} parent=11 // pred_check
          %p154 = pneg %p90
        $region14: #{tpu_custom_call.1} parent=11 // pred_check_branch
          %156 = sbr.rel (%p154) target = $region16
        $region15: #{tpu_custom_call.1} parent=11 // pred_region
          %p157 = scmp.lt.s32.totalorder %s27, 0
          %s158 = scalar_select %p157, %s27, 0
          %s159 = smul.addr %s158, 4
          %s160 = scalar_lea.vmem %s1, %s159
        $region16: #{tpu_custom_call.1} parent=11 // pred_fallthru
          _
        // Predicated region
        $region17: #{tpu_custom_call.1} parent=11 // pred_check
          %p161 = pneg %p111
        $region18: #{tpu_custom_call.1} parent=11 // pred_check_branch
          %163 = sbr.rel (%p161) target = $region20
        $region19: #{tpu_custom_call.1} parent=11 // pred_region
          _
        $region20: #{tpu_custom_call.1} parent=11 // pred_fallthru
          _
      $region12: #{tpu_custom_call.1} parent=5 // pred_fallthru
        _
      %p164 = scmp.lt.s32.totalorder %s15, 2
      // Predicated region
      $region21: #{tpu_custom_call.1} parent=5 // pred_check
        %p165 = pneg %p164
      $region22: #{tpu_custom_call.1} parent=5 // pred_check_branch
        %167 = sbr.rel (%p165) target = $region24
      $region23: #{tpu_custom_call.1} parent=5 // pred_region
        // Predicated region
        $region25: #{tpu_custom_call.1} parent=23 // pred_check
          %p168 = pneg %p58
        $region26: #{tpu_custom_call.1} parent=23 // pred_check_branch
          %170 = sbr.rel (%p168) target = $region28
        $region27: #{tpu_custom_call.1} parent=23 // pred_region
          %s171 = sand.u32 %s48, 1
          %s172 = scalar_lea.sflag [#allocation4], %s171
          %s173 = sand.u32 %s48, 1
          %s174 = smul.addr %s173, 128
          %s175 = scalar_lea.vmem [#allocation3], %s174
          %s176 = smul.u32 16, %s24
          %s177 = smul.u32 2, %s23
          %s179 = ssub.s32 2048, 2048
          %180 = vsyncadd %s172, %s179
          %s181 = smul.addr %s176, 2
          %s182 = sadd.s32 %s177, %s181
          %s183 = smul.addr %s22, 32
          %s184 = sadd.s32 %s182, %s183
          %s185 = smul.addr %s184, 64
          %s186 = scalar_lea.hbm %s0, %s185
          %s187 = sshll.u32 %s175, 4
          %s188 = int_to_ptr.vmem [resolvable:$true] %s187
          %193 = dma.hbm_to_vmem [thread:$0]  %s186, 2048, %s188, %s172, 128, 128, 8
        $region28: #{tpu_custom_call.1} parent=23 // pred_fallthru
          _
      $region24: #{tpu_custom_call.1} parent=5 // pred_fallthru
        _
      %p194 = scmp.le.s32.totalorder 1, %s15
      %p195 = scmp.lt.s32.totalorder %s15, 3
      %p196 = pnand %p194, %p195
      %p197 = pneg %p196
      // Predicated region
      $region29: #{tpu_custom_call.1} parent=5 // pred_check
        _
      $region30: #{tpu_custom_call.1} parent=5 // pred_check_branch
        %199 = sbr.rel (%p196) target = $region32
      $region31: #{tpu_custom_call.1} parent=5 // pred_region
        %s200 = ssub.s32 %s15, 1
        %s201 = sand.u32 %s51, 1
        %s202 = scalar_lea.sflag [#allocation4], %s201
        %s203 = sand.u32 %s51, 1
        %s204 = smul.addr %s203, 128
        %s205 = scalar_lea.vmem [#allocation3], %s204
        // Predicated region
        $region33: #{tpu_custom_call.1} parent=31 // pred_check
          %p206 = pneg %p64
        $region34: #{tpu_custom_call.1} parent=31 // pred_check_branch
          %208 = sbr.rel (%p206) target = $region36
        $region35: #{tpu_custom_call.1} parent=31 // pred_region
          %209 = dma.done %s202, 2048
        $region36: #{tpu_custom_call.1} parent=31 // pred_fallthru
          _
        %s210 = sand.u32 %s51, 1
        %s211 = scalar_lea.sflag [#allocation4], %s210
        %s212 = sand.u32 %s51, 1
        %s213 = smul.addr %s212, 128
        %s214 = scalar_lea.vmem [#allocation3], %s213
        %p215 = pneg %p64
        %p216 = pneg %p61
        %p217 = scmp.lt.s32.totalorder %s27, 0
        %s218 = scalar_select %p217, %s27, 0
        %s219 = smul.addr %s218, 4
        %s220 = scalar_lea.vmem %s1, %s219
        %p221 = pneg %p90
        %p222 = pneg %p87
        %p223 = pneg %p111
        %p224 = pneg %p108
        %p225 = pneg %p139
        %p226 = pneg %p136
        %s227 = sand.u32 %s126, 1
        %s228 = scalar_lea.sflag [#allocation5], %s227
        %s229 = sand.u32 %s126, 1
        %s230 = smul.addr %s229, 8
        %s231 = scalar_lea.vmem [#allocation6], %s230
        %s232 = smul.u32 16, %s27
        %s233 = smul.u32 2, %s26
        %p234 = scmp.lt.s32.totalorder %s27, 0
        %s235 = scalar_select %p234, %s27, 0
        %s236 = smul.addr %s235, 4
        %s237 = scalar_lea.vmem %s1, %s236
        %s238 = smul.u32 2, %s26
        %p240 = scmp.eq.s32.totalorder %s27, 0
        // Predicated region
        $region37: #{tpu_custom_call.1} parent=31 // pred_check
          %p241 = pneg %p240
        $region38: #{tpu_custom_call.1} parent=31 // pred_check_branch
          %243 = sbr.rel (%p241) target = $region40
        $region39: #{tpu_custom_call.1} parent=31 // pred_region
          %244 = vst [vmem:[#allocation2] sm:$0xff] 0.0
          %245 = vst [vmem:[#allocation2 + $0x8] sm:$0xff] 0.0
        $region40: #{tpu_custom_call.1} parent=31 // pred_fallthru
          _
        %v246 = vld [vmem:[#allocation2] sm:$0xff]
        %v247 = vld [vmem:[#allocation2 + $0x8] sm:$0xff]
        %v248 = vld [vmem:[%s237] sm:$0xf]
        %v249 = vld [vmem:[%s205] sm:$0xff]
        %v250 = vld [vmem:[%s205 + $0x8] sm:$0xff]
        %v251 = vld [vmem:[%s205 + $0x10] sm:$0xff]
        %v252 = vld [vmem:[%s205 + $0x18] sm:$0xff]
        %v253 = vld [vmem:[%s205 + $0x20] sm:$0xff]
        %v254 = vld [vmem:[%s205 + $0x28] sm:$0xff]
        %v255 = vld [vmem:[%s205 + $0x30] sm:$0xff]
        %v256 = vld [vmem:[%s205 + $0x38] sm:$0xff]
        %v257 = vld [vmem:[%s205 + $0x40] sm:$0xff]
        %v258 = vld [vmem:[%s205 + $0x48] sm:$0xff]
        %v259 = vld [vmem:[%s205 + $0x50] sm:$0xff]
        %v260 = vld [vmem:[%s205 + $0x58] sm:$0xff]
        %v261 = vld [vmem:[%s205 + $0x60] sm:$0xff]
        %v262 = vld [vmem:[%s205 + $0x68] sm:$0xff]
        %v263 = vld [vmem:[%s205 + $0x70] sm:$0xff]
        %v264 = vld [vmem:[%s205 + $0x78] sm:$0xff]
        %v281 = vunpack.c.l.b16 %v249
        %v282 = vunpack.c.h.b16 %v249
        %v283 = vunpack.c.l.b16 %v250
        %v284 = vunpack.c.h.b16 %v250
        %v285 = vunpack.c.l.b16 %v251
        %v286 = vunpack.c.h.b16 %v251
        %v287 = vunpack.c.l.b16 %v252
        %v288 = vunpack.c.h.b16 %v252
        %v289 = vunpack.c.l.b16 %v253
        %v290 = vunpack.c.h.b16 %v253
        %v291 = vunpack.c.l.b16 %v254
        %v292 = vunpack.c.h.b16 %v254
        %v293 = vunpack.c.l.b16 %v255
        %v294 = vunpack.c.h.b16 %v255
        %v295 = vunpack.c.l.b16 %v256
        %v296 = vunpack.c.h.b16 %v256
        %v297 = vunpack.c.l.b16 %v257
        %v298 = vunpack.c.h.b16 %v257
        %v299 = vunpack.c.l.b16 %v258
        %v300 = vunpack.c.h.b16 %v258
        %v301 = vunpack.c.l.b16 %v259
        %v302 = vunpack.c.h.b16 %v259
        %v303 = vunpack.c.l.b16 %v260
        %v304 = vunpack.c.h.b16 %v260
        %v305 = vunpack.c.l.b16 %v261
        %v306 = vunpack.c.h.b16 %v261
        %v307 = vunpack.c.l.b16 %v262
        %v308 = vunpack.c.h.b16 %v262
        %v309 = vunpack.c.l.b16 %v263
        %v310 = vunpack.c.h.b16 %v263
        %v311 = vunpack.c.l.b16 %v264
        %v312 = vunpack.c.h.b16 %v264
        %v313 = vpack.c.b16 %v283, %v281
        %v314 = vpack.c.b16 %v284, %v282
        %v315 = vpack.c.b16 %v287, %v285
        %v316 = vpack.c.b16 %v288, %v286
        %v317 = vpack.c.b16 %v291, %v289
        %v318 = vpack.c.b16 %v292, %v290
        %v319 = vpack.c.b16 %v295, %v293
        %v320 = vpack.c.b16 %v296, %v294
        %v321 = vpack.c.b16 %v299, %v297
        %v322 = vpack.c.b16 %v300, %v298
        %v323 = vpack.c.b16 %v303, %v301
        %v324 = vpack.c.b16 %v304, %v302
        %v325 = vpack.c.b16 %v307, %v305
        %v326 = vpack.c.b16 %v308, %v306
        %v327 = vpack.c.b16 %v311, %v309
        %v328 = vpack.c.b16 %v312, %v310
        %345 = vmatprep.subr.bf16.mxu0 %v314
        %346 = vmatpush1.bf16.msra.mxu0 %v313
        %347 = vmatprep.subr.bf16.mxu0 %v316
        %348 = vmatpush1.bf16.msra.mxu0 %v315
        %349 = vmatprep.subr.bf16.mxu0 %v318
        %350 = vmatpush1.bf16.msra.mxu0 %v317
        %351 = vmatprep.subr.bf16.mxu0 %v320
        %352 = vmatpush1.bf16.msra.mxu0 %v319
        %353 = vmatprep.subr.bf16.mxu0 %v322
        %354 = vmatpush1.bf16.msra.mxu0 %v321
        %355 = vmatprep.subr.bf16.mxu0 %v324
        %356 = vmatpush1.bf16.msra.mxu0 %v323
        %357 = vmatprep.subr.bf16.mxu0 %v326
        %358 = vmatpush1.bf16.msra.mxu0 %v325
        %359 = vmatprep.subr.bf16.mxu0 %v328
        %360 = vmatpush1.bf16.msra.mxu0 %v327
        %361 = vmatprep.subr.bf16.mxu0 0
        %362 = vmatpush1.bf16.msra.mxu0 0
        %363 = vmatprep.subr.bf16.mxu0 0
        %364 = vmatpush1.bf16.msra.mxu0 0
        %365 = vmatprep.subr.bf16.mxu0 0
        %366 = vmatpush1.bf16.msra.mxu0 0
        %367 = vmatprep.subr.bf16.mxu0 0
        %368 = vmatpush1.bf16.msra.mxu0 0
        %369 = vmatprep.subr.bf16.mxu0 0
        %370 = vmatpush1.bf16.msra.mxu0 0
        %371 = vmatprep.subr.bf16.mxu0 0
        %372 = vmatpush1.bf16.msra.mxu0 0
        %373 = vmatprep.subr.bf16.mxu0 0
        %374 = vmatpush1.bf16.msra.mxu0 0
        %375 = vmatprep.subr.bf16.mxu0 0
        %376 = vmatpush1.bf16.msra.mxu0 0
        %377 = vmatprep.mubr.bf16.mxu0 0
        %378 = vmatmul.mubr.bf16.gmra.mrb[0].mxu0 %v248
        %v379 = vpop.f32.mrb[0].mxu0
        %v380 = vadd.f32 0.0, %v379
        %v381 = vpop.f32.mrb[0].mxu0
        %v382 = vadd.f32 0.0, %v381
        %v383 = vpop.f32.mrb[0].mxu0
        %v384 = vpop.f32.mrb[0].mxu0
        %385 = vdwg.mxu0
        %v386 = vadd.f32 %v246, %v380
        %v387 = vadd.f32 %v247, %v382
        %388 = vst [vmem:[#allocation2] sm:$0xff] %v386
        %389 = vst [vmem:[#allocation2 + $0x8] sm:$0xff] %v387
        // Predicated region
        $region41: #{tpu_custom_call.1} parent=31 // pred_check
          %p390 = pneg %p240
        $region42: #{tpu_custom_call.1} parent=31 // pred_check_branch
          %392 = sbr.rel (%p390) target = $region44
        $region43: #{tpu_custom_call.1} parent=31 // pred_region
          %v393 = vld [vmem:[#allocation2] sm:$0xff]
          %v394 = vld [vmem:[#allocation2 + $0x8] sm:$0xff]
          %v395 = vld [vmem:[%s2] sm:$0xff]
          %397 = vset.pattern.permute.xlu0 0
          %398 = vperm.xlu0 %397, %v395
          %v399 = vpop.permute.xlu0 %398
          %v401 = vadd.f32 %v393, %v399
          %v402 = vadd.f32 %v394, %v399
          %v403 = vsub.f32 0.0, %v401
          %v404 = vsub.f32 0.0, %v402
          %v405 = vmul.f32 %v403, 1.442695
          %v406 = vpow.pop %v405
          %v407 = vmul.f32 %v404, 1.442695
          %v408 = vpow.pop %v407
          %v409 = vadd.f32 %v406, 1.0
          %v410 = vadd.f32 %v408, 1.0
          %v411 = vrcp.pop %v409
          %v412 = vrcp.pop %v410
          %v413 = vmul.f32 %v401, %v411
          %v414 = vmul.f32 %v402, %v412
          %v415 = vpack.c.bf16 %v413, %v413
          %v416 = vpack.c.bf16 %v414, %v414
          %v419 = vunpack.c.l.b16 %v415
          %v420 = vunpack.c.l.b16 %v416
          %v421 = vpack.c.b16 %v420, %v419
          %423 = vst [vmem:[%s231] sm:$0xff] %v421
        $region44: #{tpu_custom_call.1} parent=31 // pred_fallthru
          _
        %s424 = sand.u32 %s126, 1
        %s425 = scalar_lea.sflag [#allocation5], %s424
        %s426 = sand.u32 %s126, 1
        %s427 = smul.addr %s426, 8
        %s428 = scalar_lea.vmem [#allocation6], %s427
        // Predicated region
        $region45: #{tpu_custom_call.1} parent=31 // pred_check
          %p429 = pneg %p136
        $region46: #{tpu_custom_call.1} parent=31 // pred_check_branch
          %431 = sbr.rel (%p429) target = $region48
        $region47: #{tpu_custom_call.1} parent=31 // pred_region
          %s432 = smul.u32 2, %s26
          %s434 = ssub.s32 128, 128
          %435 = vsyncadd %s425, %s434
          %s436 = smul.addr %s25, 2
          %s437 = sadd.s32 %s432, %s436
          %s438 = smul.addr %s437, 64
          %s439 = scalar_lea.hbm %s3, %s438
          %s441 = sshll.u32 %s428, 4
          %s442 = int_to_ptr.vmem [resolvable:$true] %s441
          %444 = dma.vmem_to_hbm [thread:$0]  %s442, 128, %s439, %s425
        $region48: #{tpu_custom_call.1} parent=31 // pred_fallthru
          _
      $region32: #{tpu_custom_call.1} parent=5 // pred_fallthru
        _
      %p445 = scmp.le.s32.totalorder 2, %s15
      // Predicated region
      $region49: #{tpu_custom_call.1} parent=5 // pred_check
        %p446 = pneg %p445
      $region50: #{tpu_custom_call.1} parent=5 // pred_check_branch
        %448 = sbr.rel (%p446) target = $region52
      $region51: #{tpu_custom_call.1} parent=5 // pred_region
        %s449 = ssub.s32 %s15, 2
        // Predicated region
        $region53: #{tpu_custom_call.1} parent=51 // pred_check
          %p450 = pneg %p142
        $region54: #{tpu_custom_call.1} parent=51 // pred_check_branch
          %452 = sbr.rel (%p450) target = $region56
        $region55: #{tpu_custom_call.1} parent=51 // pred_region
          %s453 = sand.u32 %s127, 1
          %s454 = scalar_lea.sflag [#allocation5], %s453
          %s455 = sand.u32 %s127, 1
          %s456 = smul.addr %s455, 8
          %s457 = scalar_lea.vmem [#allocation6], %s456
          %458 = dma.done %s454, 128
        $region56: #{tpu_custom_call.1} parent=51 // pred_fallthru
          _
      $region52: #{tpu_custom_call.1} parent=5 // pred_fallthru
        _
    $region6: #{tpu_custom_call.1} parent=1 // loop_footer
      %s19 = sadd.s32 1, %s15
    $region7: #{tpu_custom_call.1} parent=1 // loop_footer_branch
      %14 = sbr.rel target = $region3
    $region8: #{tpu_custom_call.1} parent=1 // loop_exit
      _
    %459 = vsyncpa [#allocation4], 1
    %s460 = scalar_lea.sflag [#allocation4], 1
    %461 = vsyncpa %s460, 1
    %462 = vsyncpa [#allocation5], 1
    %s463 = scalar_lea.sflag [#allocation5], 1
    %464 = vsyncpa %s463, 1

</llo_original>
